<compile_context>
chip_gen: v5e
topology: v5e:2x2
jax: 0.10.0
libtpu: 0.0.40
codegen_flags: <defaults>
</compile_context>

<pallas_src>
import functools

import jax
import jax.numpy as jnp
from jax.experimental import pallas as pl
from jax.experimental.pallas import tpu as pltpu


# ----------------------------- Pallas kernel --------------------------------


def _infd_fused_kernel(x_ref, noise_ref, we_ref, be_ref,
                       w1_ref, b1_ref, w2_ref, b2_ref,
                       zdec_ref, z_ref, kl_ref, *, z_ch, batch, hw):
    """Fused encoder -> Gaussian sample + KL -> decoder, whole batch in one step.

    x_ref:     (C_in, B*HW)   input, batch folded onto the lane axis
    noise_ref: (Z, B*HW)      standard-normal noise for the reparameterized sample
    we_ref:    (2Z, C_in)     encoder 1x1-conv weight (mean & logvar halves merged)
    be_ref:    (2Z, 1)        encoder bias
    w1_ref:    (HID, Z),  b1_ref: (HID, 1)      decoder conv1
    w2_ref:    (C_out, HID), b2_ref: (C_out, 1) decoder conv2
    zdec_ref:  (C_out, B*HW)  decoded output (VMEM)
    z_ref:     (Z, B*HW)      sampled latent (VMEM)
    kl_ref:    (B,)           per-sample KL (SMEM scalars)
    """
    x = x_ref[...]                                         # (C_in, B*HW)

    # --- encoder 1x1 conv: single merged matmul; bf16 operands, f32 accumulation ---
    zp = jnp.dot(we_ref[...].astype(jnp.bfloat16), x.astype(jnp.bfloat16),
                 preferred_element_type=jnp.float32) + be_ref[...]
    # torch.chunk(z, 2, dim=1): sublane-axis split at row Z (vreg-aligned, free).
    mean = zp[:z_ch]                                       # (Z, B*HW)
    logvar = jnp.clip(zp[z_ch:], -30.0, 20.0)

    # --- DiagonalGaussianDistribution: one exp; var = std*std (VPU, free slot) ---
    std = jnp.exp(0.5 * logvar)
    var = std * std
    z = mean + std * noise_ref[...]
    z_ref[...] = z.astype(z_ref.dtype)

    # KL(q || N(0, I)) summed over latent channels & spatial positions, per sample.
    terms = mean * mean + var - 1.0 - logvar               # (Z, B*HW)
    for b in range(batch):                                 # static tiny loop; lane
        kl_ref[b] = 0.5 * jnp.sum(terms[:, b * hw:(b + 1) * hw])  # slices at x128

    # --- decoder: 1x1 conv -> GELU(tanh approx) -> 1x1 conv ---
    h = jnp.dot(w1_ref[...].astype(jnp.bfloat16), z.astype(jnp.bfloat16),
                preferred_element_type=jnp.float32) + b1_ref[...]
    h = jax.nn.gelu(h, approximate=True)
    o = jnp.dot(w2_ref[...].astype(jnp.bfloat16), h.astype(jnp.bfloat16),
                preferred_element_type=jnp.float32) + b2_ref[...]
    zdec_ref[...] = o.astype(zdec_ref.dtype)


# ------------------------------ JAX wrappers ---------------------------------


def infd_fused(x, noise, w_enc, b_enc, w1, b1, w2, b2, batch, hw):
    """x: (C_in, B*HW) -> (z_dec: (C_out, B*HW), z: (Z, B*HW), kl: (B,))."""
    C_in, BHW = x.shape
    Z = w_enc.shape[0] // 2
    C_out = w2.shape[0]

    vmem = pl.BlockSpec(memory_space=pltpu.MemorySpace.VMEM)
    kernel = functools.partial(_infd_fused_kernel, z_ch=Z, batch=batch, hw=hw)

    z_dec, z, kl = pl.pallas_call(
        kernel,
        out_shape=(
            jax.ShapeDtypeStruct((C_out, BHW), jnp.float32),
            jax.ShapeDtypeStruct((Z, BHW), jnp.float32),
            jax.ShapeDtypeStruct((batch,), jnp.float32),
        ),
        in_specs=[vmem] * 8,
        out_specs=(
            vmem,
            vmem,
            pl.BlockSpec(memory_space=pltpu.MemorySpace.SMEM),
        ),
    )(x, noise, w_enc, b_enc, w1, b1, w2, b2)
    return z_dec, z, kl


@functools.partial(jax.jit, static_argnames=("mode",))
def infd_forward(inp_nchw, noise_nchw, params, mode="z_dec", kl_loss_weight=1.0):
    """INFDBase.forward with z_gaussian=True, quantizer=None, z_dm=None, has_opt=None.

    inp_nchw:   (B, C_in, H, W)  NCHW input (PyTorch convention)
    noise_nchw: (B, Z, H, W)     reparameterization noise (shape of `mean`)
    Returns (ret_z, ret) like the PyTorch module, with ret_z in NCHW.
    """
    B, C_in, H, W = inp_nchw.shape
    HW = H * W

    # Fold batch onto the lane axis: (B, C, H, W) -> (C, B*HW).  Tiny XLA transpose.
    x = jnp.transpose(inp_nchw.reshape(B, C_in, HW), (1, 0, 2)).reshape(C_in, B * HW)

    w_enc = params["w_enc"]                    # (2Z, C_in) — kept whole (merged matmul)
    Z = w_enc.shape[0] // 2
    b_enc = params["b_enc"].reshape(-1, 1)     # (2Z, 1)
    w1 = params["w1"]                          # (HID, Z)
    b1 = params["b1"].reshape(-1, 1)           # (HID, 1)
    w2 = params["w2"]                          # (C_out, HID)
    b2 = params["b2"].reshape(-1, 1)           # (C_out, 1)

    noise = jnp.transpose(noise_nchw.reshape(B, Z, HW), (1, 0, 2)).reshape(Z, B * HW)

    z_dec, z, kl_per_sample = infd_fused(x, noise, w_enc, b_enc, w1, b1, w2, b2, B, HW)

    kl_loss = jnp.mean(kl_per_sample)          # posterior.kl().mean()
    loss = jnp.float32(0.0) + kl_loss * kl_loss_weight

    if mode == "z_dec":
        C_out = z_dec.shape[0]
        ret_z = jnp.transpose(z_dec.reshape(C_out, B, HW), (1, 0, 2)).reshape(B, C_out, H, W)
    elif mode == "z":
        ret_z = jnp.transpose(z.reshape(Z, B, HW), (1, 0, 2)).reshape(B, Z, H, W)
    else:
        raise ValueError(mode)

    ret = {"kl_loss": kl_loss, "loss": loss}
    return ret_z, ret


# --------------------------- pure-JAX reference -------------------------------


def _reference_forward(inp, noise, params):
    """Pure-JAX (f32 matmul) reference of the same forward, for sanity checking."""
    B, C_in, H, W = inp.shape
    HW = H * W
    w_enc = params["w_enc"]
    Z = w_enc.shape[0] // 2
    x = inp.reshape(B, C_in, HW)
    zp = jnp.einsum("oc,bcs->bos", w_enc, x) + params["b_enc"][None, :, None]
    mean, logvar = zp[:, :Z], jnp.clip(zp[:, Z:], -30.0, 20.0)
    std = jnp.exp(0.5 * logvar)
    var = jnp.exp(logvar)
    z = mean + std * noise.reshape(B, Z, HW)
    kl = 0.5 * jnp.sum(mean ** 2 + var - 1.0 - logvar, axis=(1, 2))
    h = jnp.einsum("oc,bcs->bos", params["w1"], z) + params["b1"][None, :, None]
    h = jax.nn.gelu(h, approximate=True)
    o = jnp.einsum("oc,bcs->bos", params["w2"], h) + params["b2"][None, :, None]
    return o.reshape(B, -1, H, W), z.reshape(B, Z, H, W), kl


# --------------------------------- main --------------------------------------

if __name__ == "__main__":
    # Small shapes consistent with the module:
    #   inp: (B=2, C_in=4, H=16, W=16);  z_shape = (Z=8, 16, 16);
    #   encoder -> 2*Z channels (Gaussian posterior params), decoder hidden = 32,
    #   decoder output channels = 4.
    B, C_in, H, W = 2, 4, 16, 16
    Z, HID, C_OUT = 8, 32, 4

    key = jax.random.PRNGKey(0)
    k_inp, k_noise, k_we, k_be, k_w1, k_b1, k_w2, k_b2 = jax.random.split(key, 8)

    inp = jax.random.normal(k_inp, (B, C_in, H, W), dtype=jnp.float32)
    # Reparameterization noise in NCHW (shape of `mean`), like torch.randn(mean.shape).
    noise = jax.random.normal(k_noise, (B, Z, H, W), dtype=jnp.float32)

    params = {
        # conv-style (out_ch, in_ch) 1x1-conv weights, (out_ch,) biases
        "w_enc": 0.1 * jax.random.normal(k_we, (2 * Z, C_in), dtype=jnp.float32),
        "b_enc": 0.1 * jax.random.normal(k_be, (2 * Z,), dtype=jnp.float32),
        "w1": 0.1 * jax.random.normal(k_w1, (HID, Z), dtype=jnp.float32),
        "b1": 0.1 * jax.random.normal(k_b1, (HID,), dtype=jnp.float32),
        "w2": 0.1 * jax.random.normal(k_w2, (C_OUT, HID), dtype=jnp.float32),
        "b2": 0.1 * jax.random.normal(k_b2, (C_OUT,), dtype=jnp.float32),
    }

    ret_z, ret = infd_forward(inp, noise, params, mode="z_dec")
    jax.block_until_ready((ret_z, ret))
    ret_zs, ret2 = infd_forward(inp, noise, params, mode="z")
    jax.block_until_ready((ret_zs, ret2))

    assert ret_z.shape == (B, C_OUT, H, W), ret_z.shape
    assert ret_zs.shape == (B, Z, H, W), ret_zs.shape
    assert jnp.isfinite(ret["loss"]).item()
    assert jnp.isfinite(ret["kl_loss"]).item()
    assert jnp.isfinite(ret_z).all().item()
    assert jnp.isfinite(ret_zs).all().item()

    # Sanity check against a pure-f32 JAX reference (loose tolerance: kernel
    # matmuls use bf16 operands with f32 accumulation).
    ref_zdec, ref_z, ref_kl = _reference_forward(inp, noise, params)
    assert jnp.allclose(ret_z, ref_zdec, atol=3e-2, rtol=3e-2).item()
    assert jnp.allclose(ret_zs, ref_z, atol=3e-2, rtol=3e-2).item()
    assert jnp.allclose(ret["kl_loss"], jnp.mean(ref_kl), atol=3e-2, rtol=3e-2).item()

    print("KERNEL_OK")
</pallas_src>

<mosaic_0001>
module attributes {stable_mosaic.version = 11 : i64} {
  func.func @_infd_fused_kernel(%arg0: memref<4x512xf32, #tpu.memory_space<vmem>>, %arg1: memref<8x512xf32, #tpu.memory_space<vmem>>, %arg2: memref<16x4xf32, #tpu.memory_space<vmem>>, %arg3: memref<16x1xf32, #tpu.memory_space<vmem>>, %arg4: memref<32x8xf32, #tpu.memory_space<vmem>>, %arg5: memref<32x1xf32, #tpu.memory_space<vmem>>, %arg6: memref<4x32xf32, #tpu.memory_space<vmem>>, %arg7: memref<4x1xf32, #tpu.memory_space<vmem>>, %arg8: memref<4x512xf32, #tpu.memory_space<vmem>>, %arg9: memref<8x512xf32, #tpu.memory_space<vmem>>, %arg10: memref<2xf32, #tpu.memory_space<smem>>) attributes {dimension_semantics = [], scalar_prefetch = 0 : i64, scratch_operands = 0 : i64, tpu.core_type = #tpu.core_type<tc>} {
    %c0 = arith.constant 0 : index
    %c0_0 = arith.constant 0 : index
    %0 = vector.load %arg0[%c0, %c0_0] : memref<4x512xf32, #tpu.memory_space<vmem>>, vector<4x512xf32>
    %c0_1 = arith.constant 0 : index
    %c0_2 = arith.constant 0 : index
    %1 = vector.load %arg2[%c0_1, %c0_2] : memref<16x4xf32, #tpu.memory_space<vmem>>, vector<16x4xf32>
    %2 = arith.truncf %1 : vector<16x4xf32> to vector<16x4xbf16>
    %3 = arith.truncf %0 : vector<4x512xf32> to vector<4x512xbf16>
    %cst = arith.constant dense<0.000000e+00> : vector<16x512xf32>
    %4 = tpu.matmul %2, %3, %cst {dimension_numbers = #tpu.dot_dimension_numbers<[1], [0], [0], [1], [0, 0, 1, 1], [], []>} : vector<16x4xbf16>, vector<4x512xbf16>, vector<16x512xf32> -> vector<16x512xf32>
    %c0_3 = arith.constant 0 : index
    %c0_4 = arith.constant 0 : index
    %5 = vector.load %arg3[%c0_3, %c0_4] : memref<16x1xf32, #tpu.memory_space<vmem>>, vector<16x1xf32>
    %6 = vector.broadcast %5 : vector<16x1xf32> to vector<16x512xf32>
    %7 = arith.addf %4, %6 : vector<16x512xf32>
    %8 = vector.extract_strided_slice %7 {offsets = [0, 0], sizes = [8, 512], strides = [1, 1]} : vector<16x512xf32> to vector<8x512xf32>
    %9 = vector.extract_strided_slice %7 {offsets = [8, 0], sizes = [8, 512], strides = [1, 1]} : vector<16x512xf32> to vector<8x512xf32>
    %cst_5 = arith.constant -3.000000e+01 : f32
    %cst_6 = arith.constant 2.000000e+01 : f32
    %10 = vector.broadcast %cst_5 : f32 to vector<8x512xf32>
    %11 = arith.maximumf %10, %9 : vector<8x512xf32>
    %12 = vector.broadcast %cst_6 : f32 to vector<8x512xf32>
    %13 = arith.minimumf %12, %11 : vector<8x512xf32>
    %cst_7 = arith.constant 5.000000e-01 : f32
    %14 = vector.broadcast %cst_7 : f32 to vector<8x512xf32>
    %15 = arith.mulf %14, %13 : vector<8x512xf32>
    %16 = math.exp %15 : vector<8x512xf32>
    %17 = arith.mulf %16, %16 : vector<8x512xf32>
    %c0_8 = arith.constant 0 : index
    %c0_9 = arith.constant 0 : index
    %18 = vector.load %arg1[%c0_8, %c0_9] : memref<8x512xf32, #tpu.memory_space<vmem>>, vector<8x512xf32>
    %19 = arith.mulf %16, %18 : vector<8x512xf32>
    %20 = arith.addf %8, %19 : vector<8x512xf32>
    %c0_10 = arith.constant 0 : index
    %c0_11 = arith.constant 0 : index
    %21 = vector.load %arg9[%c0_10, %c0_11] : memref<8x512xf32, #tpu.memory_space<vmem>>, vector<8x512xf32>
    tpu.vector_store %arg9[%c0_10, %c0_11], %20 {strides = array<i32>} : memref<8x512xf32, #tpu.memory_space<vmem>>, vector<8x512xf32>,
    %22 = arith.mulf %8, %8 : vector<8x512xf32>
    %23 = arith.addf %22, %17 : vector<8x512xf32>
    %cst_12 = arith.constant 1.000000e+00 : f32
    %24 = vector.broadcast %cst_12 : f32 to vector<8x512xf32>
    %25 = arith.subf %23, %24 : vector<8x512xf32>
    %26 = arith.subf %25, %13 : vector<8x512xf32>
    %27 = vector.extract_strided_slice %26 {offsets = [0, 0], sizes = [8, 256], strides = [1, 1]} : vector<8x512xf32> to vector<8x256xf32>
    %28 = vector.shape_cast %27 : vector<8x256xf32> to vector<1x8x256xf32>
    %cst_13 = arith.constant dense<0.000000e+00> : vector<1xf32>
    %29 = vector.multi_reduction <add>, %28, %cst_13 [1, 2] : vector<1x8x256xf32> to vector<1xf32>
    %30 = vector.shape_cast %29 : vector<1xf32> to vector<1x1x1xf32>
    %31 = vector.extract %30[0, 0, 0] : f32 from vector<1x1x1xf32>
    %cst_14 = arith.constant 5.000000e-01 : f32
    %32 = arith.mulf %cst_14, %31 : f32
    %c0_15 = arith.constant 0 : index
    %33 = memref.load %arg10[%c0_15] : memref<2xf32, #tpu.memory_space<smem>>
    memref.store %32, %arg10[%c0_15] : memref<2xf32, #tpu.memory_space<smem>>
    %34 = vector.extract_strided_slice %26 {offsets = [0, 256], sizes = [8, 256], strides = [1, 1]} : vector<8x512xf32> to vector<8x256xf32>
    %35 = vector.shape_cast %34 : vector<8x256xf32> to vector<1x8x256xf32>
    %cst_16 = arith.constant dense<0.000000e+00> : vector<1xf32>
    %36 = vector.multi_reduction <add>, %35, %cst_16 [1, 2] : vector<1x8x256xf32> to vector<1xf32>
    %37 = vector.shape_cast %36 : vector<1xf32> to vector<1x1x1xf32>
    %38 = vector.extract %37[0, 0, 0] : f32 from vector<1x1x1xf32>
    %cst_17 = arith.constant 5.000000e-01 : f32
    %39 = arith.mulf %cst_17, %38 : f32
    %c1 = arith.constant 1 : index
    %40 = memref.load %arg10[%c1] : memref<2xf32, #tpu.memory_space<smem>>
    memref.store %39, %arg10[%c1] : memref<2xf32, #tpu.memory_space<smem>>
    %c0_18 = arith.constant 0 : index
    %c0_19 = arith.constant 0 : index
    %41 = vector.load %arg4[%c0_18, %c0_19] : memref<32x8xf32, #tpu.memory_space<vmem>>, vector<32x8xf32>
    %42 = arith.truncf %41 : vector<32x8xf32> to vector<32x8xbf16>
    %43 = arith.truncf %20 : vector<8x512xf32> to vector<8x512xbf16>
    %cst_20 = arith.constant dense<0.000000e+00> : vector<32x512xf32>
    %44 = tpu.matmul %42, %43, %cst_20 {dimension_numbers = #tpu.dot_dimension_numbers<[1], [0], [0], [1], [0, 0, 1, 1], [], []>} : vector<32x8xbf16>, vector<8x512xbf16>, vector<32x512xf32> -> vector<32x512xf32>
    %c0_21 = arith.constant 0 : index
    %c0_22 = arith.constant 0 : index
    %45 = vector.load %arg5[%c0_21, %c0_22] : memref<32x1xf32, #tpu.memory_space<vmem>>, vector<32x1xf32>
    %46 = vector.broadcast %45 : vector<32x1xf32> to vector<32x512xf32>
    %47 = arith.addf %44, %46 : vector<32x512xf32>
    %48 = arith.mulf %47, %47 : vector<32x512xf32>
    %49 = arith.mulf %47, %48 : vector<32x512xf32>
    %cst_23 = arith.constant 4.471500e-02 : f32
    %50 = vector.broadcast %cst_23 : f32 to vector<32x512xf32>
    %51 = arith.mulf %50, %49 : vector<32x512xf32>
    %52 = arith.addf %47, %51 : vector<32x512xf32>
    %cst_24 = arith.constant 0.797884583 : f32
    %53 = vector.broadcast %cst_24 : f32 to vector<32x512xf32>
    %54 = arith.mulf %53, %52 : vector<32x512xf32>
    %55 = math.tanh %54 : vector<32x512xf32>
    %cst_25 = arith.constant 1.000000e+00 : f32
    %56 = vector.broadcast %cst_25 : f32 to vector<32x512xf32>
    %57 = arith.addf %56, %55 : vector<32x512xf32>
    %cst_26 = arith.constant 5.000000e-01 : f32
    %58 = vector.broadcast %cst_26 : f32 to vector<32x512xf32>
    %59 = arith.mulf %58, %57 : vector<32x512xf32>
    %60 = arith.mulf %47, %59 : vector<32x512xf32>
    %c0_27 = arith.constant 0 : index
    %c0_28 = arith.constant 0 : index
    %61 = vector.load %arg6[%c0_27, %c0_28] : memref<4x32xf32, #tpu.memory_space<vmem>>, vector<4x32xf32>
    %62 = arith.truncf %61 : vector<4x32xf32> to vector<4x32xbf16>
    %63 = arith.truncf %60 : vector<32x512xf32> to vector<32x512xbf16>
    %cst_29 = arith.constant dense<0.000000e+00> : vector<4x512xf32>
    %64 = tpu.matmul %62, %63, %cst_29 {dimension_numbers = #tpu.dot_dimension_numbers<[1], [0], [0], [1], [0, 0, 1, 1], [], []>} : vector<4x32xbf16>, vector<32x512xbf16>, vector<4x512xf32> -> vector<4x512xf32>
    %c0_30 = arith.constant 0 : index
    %c0_31 = arith.constant 0 : index
    %65 = vector.load %arg7[%c0_30, %c0_31] : memref<4x1xf32, #tpu.memory_space<vmem>>, vector<4x1xf32>
    %66 = vector.broadcast %65 : vector<4x1xf32> to vector<4x512xf32>
    %67 = arith.addf %64, %66 : vector<4x512xf32>
    %c0_32 = arith.constant 0 : index
    %c0_33 = arith.constant 0 : index
    %68 = vector.load %arg8[%c0_32, %c0_33] : memref<4x512xf32, #tpu.memory_space<vmem>>, vector<4x512xf32>
    tpu.vector_store %arg8[%c0_32, %c0_33], %67 {strides = array<i32>} : memref<4x512xf32, #tpu.memory_space<vmem>>, vector<4x512xf32>,
    return
  }
}

</mosaic_0001>

<llo_original>
// kernel: infd_forward.1
$region0: #{infd_forward.1}
  #allocation0 [shape = 'u32[]', space=smem, size = 0x4, offset = 0x4, fixed_abs, tag = 'smem constant byte address 0x4 - core index']
  #allocation1 [shape = 'u32[72,128]{1,0:T(1,128)}', space=vmem, size = 0x9000, scoped, tag = 'internal scratch']
  %s0 = inlined_call_operand.vmem [shape: f32[4,512], index: 0, kind: input, shape index: {}]
  %s1 = inlined_call_operand.vmem [shape: f32[8,512], index: 1, kind: input, shape index: {}]
  %s2 = inlined_call_operand.vmem [shape: f32[16,4], index: 2, kind: input, shape index: {}]
  %s3 = inlined_call_operand.vmem [shape: f32[16,1], index: 3, kind: input, shape index: {}]
  %s4 = inlined_call_operand.vmem [shape: f32[32,8], index: 4, kind: input, shape index: {}]
  %s5 = inlined_call_operand.vmem [shape: f32[32,1], index: 5, kind: input, shape index: {}]
  %s6 = inlined_call_operand.vmem [shape: f32[4,32], index: 6, kind: input, shape index: {}]
  %s7 = inlined_call_operand.vmem [shape: f32[4,1], index: 7, kind: input, shape index: {}]
  %s8 = inlined_call_operand.vmem [shape: f32[4,512], index: 8, kind: output, shape index: {0}]
  %s9 = inlined_call_operand.hbm [shape: f32[8,512], index: 9, kind: output, shape index: {1}]
  %s10 = inlined_call_operand.vmem [shape: f32[2], index: 10, kind: output, shape index: {2}]
  %11 = xla_tuple %s8, %s9, %s10
  %s12 = sld [smem:[#allocation0]]
  $region58: #{infd_forward.1} parent=0
    _
  %s14 = ssub.s32 1, %s12
  %s15 = scalar_select 0, %s14, %s12
  $region1: #{infd_forward.1} parent=0
    #allocation2 [shape = 'u8[16384]{0}', space=vmem, size = 0x4000, scoped, tag = 'output window, operand 1, single buffered']
    #allocation3 [shape = 's32[1]{0}', space=sflag, size = 0x4, scoped, tag = 'scoped memory for infd_forward.1']
    #allocation4 [shape = 's32[1]{0}', space=sflag, size = 0x4, scoped, tag = 'scoped memory for infd_forward.1']
    #allocation5 [shape = 'u8[512]{0}', space=smem, size = 0x200, scoped, tag = 'output window, operand 2, single buffered']
    %16 = vsyncpa [#allocation3], 0
    %17 = vsyncpa [#allocation4], 0
    // Predicated region
    $region2: #{infd_forward.1} parent=1 // pred_check
      _
    $region3: #{infd_forward.1} parent=1 // pred_check_branch
      %19 = sbr.rel (0) target = $region5
    $region4: #{infd_forward.1} parent=1 // pred_region
      _
    $region5: #{infd_forward.1} parent=1 // pred_fallthru
      _
    // Predicated region
    $region6: #{infd_forward.1} parent=1 // pred_check
      _
    $region7: #{infd_forward.1} parent=1 // pred_check_branch
      %21 = sbr.rel (0) target = $region9
    $region8: #{infd_forward.1} parent=1 // pred_region
      _
    $region9: #{infd_forward.1} parent=1 // pred_fallthru
      _
    // Predicated region
    $region10: #{infd_forward.1} parent=1 // pred_check
      _
    $region11: #{infd_forward.1} parent=1 // pred_check_branch
      %23 = sbr.rel (0) target = $region13
    $region12: #{infd_forward.1} parent=1 // pred_region
      _
    $region13: #{infd_forward.1} parent=1 // pred_fallthru
      _
    // Predicated region
    $region14: #{infd_forward.1} parent=1 // pred_check
      _
    $region15: #{infd_forward.1} parent=1 // pred_check_branch
      %25 = sbr.rel (0) target = $region17
    $region16: #{infd_forward.1} parent=1 // pred_region
      _
    $region17: #{infd_forward.1} parent=1 // pred_fallthru
      _
    // Predicated region
    $region18: #{infd_forward.1} parent=1 // pred_check
      _
    $region19: #{infd_forward.1} parent=1 // pred_check_branch
      %27 = sbr.rel (0) target = $region21
    $region20: #{infd_forward.1} parent=1 // pred_region
      _
    $region21: #{infd_forward.1} parent=1 // pred_fallthru
      _
    // Predicated region
    $region22: #{infd_forward.1} parent=1 // pred_check
      _
    $region23: #{infd_forward.1} parent=1 // pred_check_branch
      %29 = sbr.rel (0) target = $region25
    $region24: #{infd_forward.1} parent=1 // pred_region
      _
    $region25: #{infd_forward.1} parent=1 // pred_fallthru
      _
    // Predicated region
    $region26: #{infd_forward.1} parent=1 // pred_check
      _
    $region27: #{infd_forward.1} parent=1 // pred_check_branch
      %31 = sbr.rel (0) target = $region29
    $region28: #{infd_forward.1} parent=1 // pred_region
      _
    $region29: #{infd_forward.1} parent=1 // pred_fallthru
      _
    // Predicated region
    $region30: #{infd_forward.1} parent=1 // pred_check
      _
    $region31: #{infd_forward.1} parent=1 // pred_check_branch
      %33 = sbr.rel (0) target = $region33
    $region32: #{infd_forward.1} parent=1 // pred_region
      _
    $region33: #{infd_forward.1} parent=1 // pred_fallthru
      _
    %v35 = vld [vmem:[%s0] sm:$0xff]
    %v36 = vld [vmem:[%s0 + $0x8] sm:$0xff]
    %v37 = vld [vmem:[%s2] sm:$0xff]
    %v38 = vld [vmem:[%s2 + $0x8] sm:$0xff]
    %v39 = vpack.c.bf16 %v38, %v37
    %42 = vst [vmem:[#allocation1] ss:$2 sm:$0xff] %v35
    %s43 = scalar_lea.vmem [#allocation1], 16
    %44 = vst [vmem:[%s43] ss:$2 sm:$0xff] %v36
    %v45 = vld.sshfl [vmem:[#allocation1] sm:$0xff pattern:$0x75316420]
    %v46 = vld.sshfl [vmem:[#allocation1 + $0x8] sm:$0xff pattern:$0x75316420]
    %v47 = vld.sshfl [vmem:[#allocation1 + $0x10] sm:$0xff pattern:$0x75316420]
    %v48 = vld.sshfl [vmem:[#allocation1 + $0x18] sm:$0xff pattern:$0x75316420]
    %v53 = vpack.c.bf16 %v45, %v45
    %v54 = vpack.c.bf16 %v46, %v46
    %v55 = vpack.c.bf16 %v47, %v47
    %v56 = vpack.c.bf16 %v48, %v48
    %v57 = vld [vmem:[%s3] sm:$0xff]
    %v58 = vld [vmem:[%s3 + $0x8] sm:$0xff]
    %60 = vset.pattern.permute.xlu0 0
    %61 = vperm.xlu0 %60, %v57
    %v62 = vpop.permute.xlu0 %61
    %65 = vset.pattern.permute.xlu0 0
    %66 = vperm.xlu0 %65, %v58
    %v67 = vpop.permute.xlu0 %66
    %vm69 = vcmask 31744
    %v71 = vsel %vm69, %v39, 0
    %vm73 = vcmask 1041408
    %v75 = vsel %vm73, %v53, 0
    %v78 = vsel %vm73, %v54, 0
    %v81 = vsel %vm73, %v55, 0
    %v84 = vsel %vm73, %v56, 0
    %86 = vmatpush.bf16.msra.mxu0 0
    %87 = vmatpush.bf16.msra.mxu0 0
    %88 = vmatpush.bf16.msra.mxu0 0
    %89 = vmatpush.bf16.msra.mxu0 0
    %90 = vmatpush.bf16.msra.mxu0 0
    %91 = vmatpush.bf16.msra.mxu0 0
    %92 = vmatpush.bf16.msra.mxu0 0
    %93 = vmatpush.bf16.msra.mxu0 %v75
    %94 = vmatmul.bf16.gmra.mxu0 %v71
    %v95 = vpop.f32.mrf.mxu0
    %v96 = vadd.f32 %v62, %v95
    %v97 = vpop.f32.mrf.mxu0
    %v98 = vadd.f32 %v67, %v97
    %99 = vdwg.mxu0
    %100 = vmatpush.bf16.msra.mxu0 0
    %101 = vmatpush.bf16.msra.mxu0 0
    %102 = vmatpush.bf16.msra.mxu0 0
    %103 = vmatpush.bf16.msra.mxu0 0
    %104 = vmatpush.bf16.msra.mxu0 0
    %105 = vmatpush.bf16.msra.mxu0 0
    %106 = vmatpush.bf16.msra.mxu0 0
    %107 = vmatpush.bf16.msra.mxu0 %v78
    %108 = vmatmul.bf16.gmra.mxu0 %v71
    %v109 = vpop.f32.mrf.mxu0
    %v110 = vadd.f32 %v62, %v109
    %v111 = vpop.f32.mrf.mxu0
    %v112 = vadd.f32 %v67, %v111
    %113 = vdwg.mxu0
    %114 = vmatpush.bf16.msra.mxu0 0
    %115 = vmatpush.bf16.msra.mxu0 0
    %116 = vmatpush.bf16.msra.mxu0 0
    %117 = vmatpush.bf16.msra.mxu0 0
    %118 = vmatpush.bf16.msra.mxu0 0
    %119 = vmatpush.bf16.msra.mxu0 0
    %120 = vmatpush.bf16.msra.mxu0 0
    %121 = vmatpush.bf16.msra.mxu0 %v81
    %122 = vmatmul.bf16.gmra.mxu0 %v71
    %v123 = vpop.f32.mrf.mxu0
    %v124 = vadd.f32 %v62, %v123
    %v125 = vpop.f32.mrf.mxu0
    %v126 = vadd.f32 %v67, %v125
    %127 = vdwg.mxu0
    %128 = vmatpush.bf16.msra.mxu0 0
    %129 = vmatpush.bf16.msra.mxu0 0
    %130 = vmatpush.bf16.msra.mxu0 0
    %131 = vmatpush.bf16.msra.mxu0 0
    %132 = vmatpush.bf16.msra.mxu0 0
    %133 = vmatpush.bf16.msra.mxu0 0
    %134 = vmatpush.bf16.msra.mxu0 0
    %135 = vmatpush.bf16.msra.mxu0 %v84
    %136 = vmatmul.bf16.gmra.mxu0 %v71
    %v137 = vpop.f32.mrf.mxu0
    %v138 = vadd.f32 %v62, %v137
    %v139 = vpop.f32.mrf.mxu0
    %v140 = vadd.f32 %v67, %v139
    %141 = vdwg.mxu0
    %v142 = vmax.f32 %v98, -30.0
    %v143 = vmax.f32 %v112, -30.0
    %v144 = vmax.f32 %v126, -30.0
    %v145 = vmax.f32 %v140, -30.0
    %v146 = vmin.f32 %v142, 20.0
    %v147 = vmin.f32 %v143, 20.0
    %v148 = vmin.f32 %v144, 20.0
    %v149 = vmin.f32 %v145, 20.0
    %v150 = vmul.f32 %v146, 0.5
    %v151 = vmul.f32 %v147, 0.5
    %v152 = vmul.f32 %v148, 0.5
    %v153 = vmul.f32 %v149, 0.5
    %v154 = vmul.f32 %v150, 1.442695
    %v155 = vpow.pop %v154
    %v156 = vmul.f32 %v151, 1.442695
    %v157 = vpow.pop %v156
    %v158 = vmul.f32 %v152, 1.442695
    %v159 = vpow.pop %v158
    %v160 = vmul.f32 %v153, 1.442695
    %v161 = vpow.pop %v160
    %v162 = vmul.f32 %v155, %v155
    %v163 = vmul.f32 %v157, %v157
    %v164 = vmul.f32 %v159, %v159
    %v165 = vmul.f32 %v161, %v161
    %v166 = vld [vmem:[%s1] sm:$0xff]
    %v167 = vld [vmem:[%s1 + $0x8] sm:$0xff]
    %v168 = vld [vmem:[%s1 + $0x10] sm:$0xff]
    %v169 = vld [vmem:[%s1 + $0x18] sm:$0xff]
    %v170 = vmul.f32 %v155, %v166
    %v171 = vmul.f32 %v157, %v167
    %v172 = vmul.f32 %v159, %v168
    %v173 = vmul.f32 %v161, %v169
    %v174 = vadd.f32 %v96, %v170
    %v175 = vadd.f32 %v110, %v171
    %v176 = vadd.f32 %v124, %v172
    %v177 = vadd.f32 %v138, %v173
    %178 = vst [vmem:[#allocation2] sm:$0xff] %v174
    %179 = vst [vmem:[#allocation2 + $0x8] sm:$0xff] %v175
    %180 = vst [vmem:[#allocation2 + $0x10] sm:$0xff] %v176
    %181 = vst [vmem:[#allocation2 + $0x18] sm:$0xff] %v177
    %v182 = vmul.f32 %v96, %v96
    %v183 = vmul.f32 %v110, %v110
    %v184 = vmul.f32 %v124, %v124
    %v185 = vmul.f32 %v138, %v138
    %v186 = vadd.f32 %v182, %v162
    %v187 = vadd.f32 %v183, %v163
    %v188 = vadd.f32 %v184, %v164
    %v189 = vadd.f32 %v185, %v165
    %v190 = vsub.f32 %v186, 1.0
    %v191 = vsub.f32 %v187, 1.0
    %v192 = vsub.f32 %v188, 1.0
    %v193 = vsub.f32 %v189, 1.0
    %v194 = vsub.f32 %v190, %v146
    %v195 = vsub.f32 %v191, %v147
    %v196 = vsub.f32 %v192, %v148
    %v197 = vsub.f32 %v193, %v149
    %v198 = vadd.f32 %v194, %v195
    %199 = vadd.xlane.f32.xlu0 %v198
    %v200 = vpop.xlane.xlu0 %199
    %v201 = vrot.slane %v200, 4
    %v202 = vadd.f32 %v200, %v201
    %v203 = vrot.slane %v202, 2
    %v204 = vadd.f32 %v202, %v203
    %v205 = vrot.slane %v204, 1
    %v206 = vadd.f32 %v204, %v205
    %s207 = vtos %v206
    %s208 = smul.f32 %s207, 0.5
    %s209 = scalar_lea.smem [#allocation5], 0
    %210 = sst [smem:[%s209]] %s208
    %v211 = vadd.f32 %v196, %v197
    %212 = vadd.xlane.f32.xlu0 %v211
    %v213 = vpop.xlane.xlu0 %212
    %v214 = vrot.slane %v213, 4
    %v215 = vadd.f32 %v213, %v214
    %v216 = vrot.slane %v215, 2
    %v217 = vadd.f32 %v215, %v216
    %v218 = vrot.slane %v217, 1
    %v219 = vadd.f32 %v217, %v218
    %s220 = vtos %v219
    %s221 = smul.f32 %s220, 0.5
    %s222 = scalar_lea.smem [#allocation5], 1
    %223 = sst [smem:[%s222]] %s221
    %v224 = vld [vmem:[%s4] sm:$0xff]
    %v225 = vld [vmem:[%s4 + $0x8] sm:$0xff]
    %v226 = vld [vmem:[%s4 + $0x10] sm:$0xff]
    %v227 = vld [vmem:[%s4 + $0x18] sm:$0xff]
    %v228 = vpack.c.bf16 %v225, %v224
    %v229 = vpack.c.bf16 %v227, %v226
    %v230 = vpack.c.bf16 %v174, %v174
    %v231 = vpack.c.bf16 %v175, %v175
    %v232 = vpack.c.bf16 %v176, %v176
    %v233 = vpack.c.bf16 %v177, %v177
    %v234 = vld [vmem:[%s5] sm:$0xff]
    %v235 = vld [vmem:[%s5 + $0x8] sm:$0xff]
    %v236 = vld [vmem:[%s5 + $0x10] sm:$0xff]
    %v237 = vld [vmem:[%s5 + $0x18] sm:$0xff]
    %239 = vset.pattern.permute.xlu0 0
    %240 = vperm.xlu0 %239, %v234
    %v241 = vpop.permute.xlu0 %240
    %244 = vset.pattern.permute.xlu0 0
    %245 = vperm.xlu0 %244, %v235
    %v246 = vpop.permute.xlu0 %245
    %249 = vset.pattern.permute.xlu0 0
    %250 = vperm.xlu0 %249, %v236
    %v251 = vpop.permute.xlu0 %250
    %254 = vset.pattern.permute.xlu0 0
    %255 = vperm.xlu0 %254, %v237
    %v256 = vpop.permute.xlu0 %255
    %vm258 = vcmask 64512
    %v260 = vsel %vm258, %v228, 0
    %v263 = vsel %vm258, %v229, 0
    %vm265 = vcmask 1043456
    %v267 = vsel %vm265, %v230, 0
    %v270 = vsel %vm265, %v231, 0
    %v273 = vsel %vm265, %v232, 0
    %v276 = vsel %vm265, %v233, 0
    %278 = vmatpush.bf16.msra.mxu0 0
    %279 = vmatpush.bf16.msra.mxu0 0
    %280 = vmatpush.bf16.msra.mxu0 0
    %281 = vmatpush.bf16.msra.mxu0 0
    %282 = vmatpush.bf16.msra.mxu0 0
    %283 = vmatpush.bf16.msra.mxu0 0
    %284 = vmatpush.bf16.msra.mxu0 0
    %285 = vmatpush.bf16.msra.mxu0 %v267
    %286 = vmatmul.bf16.gmra.mxu0 %v260
    %v287 = vpop.f32.mrf.mxu0
    %v288 = vadd.f32 %v241, %v287
    %v289 = vpop.f32.mrf.mxu0
    %v290 = vadd.f32 %v246, %v289
    %291 = vmatmul.bf16.gmra.mxu0 %v263
    %v292 = vpop.f32.mrf.mxu0
    %v293 = vadd.f32 %v251, %v292
    %v294 = vpop.f32.mrf.mxu0
    %v295 = vadd.f32 %v256, %v294
    %296 = vdwg.mxu0
    %297 = vmatpush.bf16.msra.mxu0 0
    %298 = vmatpush.bf16.msra.mxu0 0
    %299 = vmatpush.bf16.msra.mxu0 0
    %300 = vmatpush.bf16.msra.mxu0 0
    %301 = vmatpush.bf16.msra.mxu0 0
    %302 = vmatpush.bf16.msra.mxu0 0
    %303 = vmatpush.bf16.msra.mxu0 0
    %304 = vmatpush.bf16.msra.mxu0 %v270
    %305 = vmatmul.bf16.gmra.mxu0 %v260
    %v306 = vpop.f32.mrf.mxu0
    %v307 = vadd.f32 %v241, %v306
    %v308 = vpop.f32.mrf.mxu0
    %v309 = vadd.f32 %v246, %v308
    %310 = vmatmul.bf16.gmra.mxu0 %v263
    %v311 = vpop.f32.mrf.mxu0
    %v312 = vadd.f32 %v251, %v311
    %v313 = vpop.f32.mrf.mxu0
    %v314 = vadd.f32 %v256, %v313
    %315 = vdwg.mxu0
    %316 = vmatpush.bf16.msra.mxu0 0
    %317 = vmatpush.bf16.msra.mxu0 0
    %318 = vmatpush.bf16.msra.mxu0 0
    %319 = vmatpush.bf16.msra.mxu0 0
    %320 = vmatpush.bf16.msra.mxu0 0
    %321 = vmatpush.bf16.msra.mxu0 0
    %322 = vmatpush.bf16.msra.mxu0 0
    %323 = vmatpush.bf16.msra.mxu0 %v273
    %324 = vmatmul.bf16.gmra.mxu0 %v260
    %v325 = vpop.f32.mrf.mxu0
    %v326 = vadd.f32 %v241, %v325
    %v327 = vpop.f32.mrf.mxu0
    %v328 = vadd.f32 %v246, %v327
    %329 = vmatmul.bf16.gmra.mxu0 %v263
    %v330 = vpop.f32.mrf.mxu0
    %v331 = vadd.f32 %v251, %v330
    %v332 = vpop.f32.mrf.mxu0
    %v333 = vadd.f32 %v256, %v332
    %334 = vdwg.mxu0
    %335 = vmatpush.bf16.msra.mxu0 0
    %336 = vmatpush.bf16.msra.mxu0 0
    %337 = vmatpush.bf16.msra.mxu0 0
    %338 = vmatpush.bf16.msra.mxu0 0
    %339 = vmatpush.bf16.msra.mxu0 0
    %340 = vmatpush.bf16.msra.mxu0 0
    %341 = vmatpush.bf16.msra.mxu0 0
    %342 = vmatpush.bf16.msra.mxu0 %v276
    %343 = vmatmul.bf16.gmra.mxu0 %v260
    %v344 = vpop.f32.mrf.mxu0
    %v345 = vadd.f32 %v241, %v344
    %v346 = vpop.f32.mrf.mxu0
    %v347 = vadd.f32 %v246, %v346
    %348 = vmatmul.bf16.gmra.mxu0 %v263
    %v349 = vpop.f32.mrf.mxu0
    %v350 = vadd.f32 %v251, %v349
    %v351 = vpop.f32.mrf.mxu0
    %v352 = vadd.f32 %v256, %v351
    %353 = vdwg.mxu0
    %v354 = vmul.f32 %v288, %v288
    %v355 = vmul.f32 %v307, %v307
    %v356 = vmul.f32 %v326, %v326
    %v357 = vmul.f32 %v345, %v345
    %v358 = vmul.f32 %v290, %v290
    %v359 = vmul.f32 %v309, %v309
    %v360 = vmul.f32 %v328, %v328
    %v361 = vmul.f32 %v347, %v347
    %v362 = vmul.f32 %v293, %v293
    %v363 = vmul.f32 %v312, %v312
    %v364 = vmul.f32 %v331, %v331
    %v365 = vmul.f32 %v350, %v350
    %v366 = vmul.f32 %v295, %v295
    %v367 = vmul.f32 %v314, %v314
    %v368 = vmul.f32 %v333, %v333
    %v369 = vmul.f32 %v352, %v352
    %v370 = vmul.f32 %v288, %v354
    %v371 = vmul.f32 %v307, %v355
    %v372 = vmul.f32 %v326, %v356
    %v373 = vmul.f32 %v345, %v357
    %v374 = vmul.f32 %v290, %v358
    %v375 = vmul.f32 %v309, %v359
    %v376 = vmul.f32 %v328, %v360
    %v377 = vmul.f32 %v347, %v361
    %v378 = vmul.f32 %v293, %v362
    %v379 = vmul.f32 %v312, %v363
    %v380 = vmul.f32 %v331, %v364
    %v381 = vmul.f32 %v350, %v365
    %v382 = vmul.f32 %v295, %v366
    %v383 = vmul.f32 %v314, %v367
    %v384 = vmul.f32 %v333, %v368
    %v385 = vmul.f32 %v352, %v369
    %v386 = vmul.f32 %v370, 0.044715
    %v387 = vmul.f32 %v371, 0.044715
    %v388 = vmul.f32 %v372, 0.044715
    %v389 = vmul.f32 %v373, 0.044715
    %v390 = vmul.f32 %v374, 0.044715
    %v391 = vmul.f32 %v375, 0.044715
    %v392 = vmul.f32 %v376, 0.044715
    %v393 = vmul.f32 %v377, 0.044715
    %v394 = vmul.f32 %v378, 0.044715
    %v395 = vmul.f32 %v379, 0.044715
    %v396 = vmul.f32 %v380, 0.044715
    %v397 = vmul.f32 %v381, 0.044715
    %v398 = vmul.f32 %v382, 0.044715
    %v399 = vmul.f32 %v383, 0.044715
    %v400 = vmul.f32 %v384, 0.044715
    %v401 = vmul.f32 %v385, 0.044715
    %v402 = vadd.f32 %v288, %v386
    %v403 = vadd.f32 %v307, %v387
    %v404 = vadd.f32 %v326, %v388
    %v405 = vadd.f32 %v345, %v389
    %v406 = vadd.f32 %v290, %v390
    %v407 = vadd.f32 %v309, %v391
    %v408 = vadd.f32 %v328, %v392
    %v409 = vadd.f32 %v347, %v393
    %v410 = vadd.f32 %v293, %v394
    %v411 = vadd.f32 %v312, %v395
    %v412 = vadd.f32 %v331, %v396
    %v413 = vadd.f32 %v350, %v397
    %v414 = vadd.f32 %v295, %v398
    %v415 = vadd.f32 %v314, %v399
    %v416 = vadd.f32 %v333, %v400
    %v417 = vadd.f32 %v352, %v401
    %v418 = vmul.f32 %v402, 0.7978846
    %v419 = vmul.f32 %v403, 0.7978846
    %v420 = vmul.f32 %v404, 0.7978846
    %v421 = vmul.f32 %v405, 0.7978846
    %v422 = vmul.f32 %v406, 0.7978846
    %v423 = vmul.f32 %v407, 0.7978846
    %v424 = vmul.f32 %v408, 0.7978846
    %v425 = vmul.f32 %v409, 0.7978846
    %v426 = vmul.f32 %v410, 0.7978846
    %v427 = vmul.f32 %v411, 0.7978846
    %v428 = vmul.f32 %v412, 0.7978846
    %v429 = vmul.f32 %v413, 0.7978846
    %v430 = vmul.f32 %v414, 0.7978846
    %v431 = vmul.f32 %v415, 0.7978846
    %v432 = vmul.f32 %v416, 0.7978846
    %v433 = vmul.f32 %v417, 0.7978846
    %v434 = vtanh.pop %v418
    %v435 = vtanh.pop %v419
    %v436 = vtanh.pop %v420
    %v437 = vtanh.pop %v421
    %v438 = vtanh.pop %v422
    %v439 = vtanh.pop %v423
    %v440 = vtanh.pop %v424
    %v441 = vtanh.pop %v425
    %v442 = vtanh.pop %v426
    %v443 = vtanh.pop %v427
    %v444 = vtanh.pop %v428
    %v445 = vtanh.pop %v429
    %v446 = vtanh.pop %v430
    %v447 = vtanh.pop %v431
    %v448 = vtanh.pop %v432
    %v449 = vtanh.pop %v433
    %v450 = vadd.f32 %v434, 1.0
    %v451 = vadd.f32 %v435, 1.0
    %v452 = vadd.f32 %v436, 1.0
    %v453 = vadd.f32 %v437, 1.0
    %v454 = vadd.f32 %v438, 1.0
    %v455 = vadd.f32 %v439, 1.0
    %v456 = vadd.f32 %v440, 1.0
    %v457 = vadd.f32 %v441, 1.0
    %v458 = vadd.f32 %v442, 1.0
    %v459 = vadd.f32 %v443, 1.0
    %v460 = vadd.f32 %v444, 1.0
    %v461 = vadd.f32 %v445, 1.0
    %v462 = vadd.f32 %v446, 1.0
    %v463 = vadd.f32 %v447, 1.0
    %v464 = vadd.f32 %v448, 1.0
    %v465 = vadd.f32 %v449, 1.0
    %v466 = vmul.f32 %v450, 0.5
    %v467 = vmul.f32 %v451, 0.5
    %v468 = vmul.f32 %v452, 0.5
    %v469 = vmul.f32 %v453, 0.5
    %v470 = vmul.f32 %v454, 0.5
    %v471 = vmul.f32 %v455, 0.5
    %v472 = vmul.f32 %v456, 0.5
    %v473 = vmul.f32 %v457, 0.5
    %v474 = vmul.f32 %v458, 0.5
    %v475 = vmul.f32 %v459, 0.5
    %v476 = vmul.f32 %v460, 0.5
    %v477 = vmul.f32 %v461, 0.5
    %v478 = vmul.f32 %v462, 0.5
    %v479 = vmul.f32 %v463, 0.5
    %v480 = vmul.f32 %v464, 0.5
    %v481 = vmul.f32 %v465, 0.5
    %v482 = vmul.f32 %v288, %v466
    %v483 = vmul.f32 %v307, %v467
    %v484 = vmul.f32 %v326, %v468
    %v485 = vmul.f32 %v345, %v469
    %v486 = vmul.f32 %v290, %v470
    %v487 = vmul.f32 %v309, %v471
    %v488 = vmul.f32 %v328, %v472
    %v489 = vmul.f32 %v347, %v473
    %v490 = vmul.f32 %v293, %v474
    %v491 = vmul.f32 %v312, %v475
    %v492 = vmul.f32 %v331, %v476
    %v493 = vmul.f32 %v350, %v477
    %v494 = vmul.f32 %v295, %v478
    %v495 = vmul.f32 %v314, %v479
    %v496 = vmul.f32 %v333, %v480
    %v497 = vmul.f32 %v352, %v481
    %v498 = vld [vmem:[%s6] sm:$0xf]
    %v499 = vpack.c.bf16 %v498, %v498
    %v500 = vpack.c.bf16 %v486, %v482
    %v501 = vpack.c.bf16 %v487, %v483
    %v502 = vpack.c.bf16 %v488, %v484
    %v503 = vpack.c.bf16 %v489, %v485
    %v504 = vpack.c.bf16 %v494, %v490
    %v505 = vpack.c.bf16 %v495, %v491
    %v506 = vpack.c.bf16 %v496, %v492
    %v507 = vpack.c.bf16 %v497, %v493
    %v508 = vld [vmem:[%s7] sm:$0xf]
    %510 = vset.pattern.permute.xlu0 0
    %511 = vperm.xlu0 %510, %v508
    %v512 = vpop.permute.xlu0 %511
    %vm514 = vcmask 261120
    %v516 = vsel %vm514, %v499, 0
    %518 = vmatpush.bf16.msra.mxu0 0
    %519 = vmatpush.bf16.msra.mxu0 0
    %520 = vmatpush.bf16.msra.mxu0 0
    %521 = vmatpush.bf16.msra.mxu0 0
    %522 = vmatpush.bf16.msra.mxu0 0
    %523 = vmatpush.bf16.msra.mxu0 0
    %524 = vmatpush.bf16.msra.mxu0 %v504
    %525 = vmatpush.bf16.msra.mxu0 %v500
    %526 = vmatmul.bf16.gmra.mxu0 %v516
    %v527 = vpop.f32.mrf.mxu0
    %v528 = vadd.f32 %v512, %v527
    %v529 = vpop.f32.mrf.mxu0
    %530 = vdwg.mxu0
    %531 = vmatpush.bf16.msra.mxu0 0
    %532 = vmatpush.bf16.msra.mxu0 0
    %533 = vmatpush.bf16.msra.mxu0 0
    %534 = vmatpush.bf16.msra.mxu0 0
    %535 = vmatpush.bf16.msra.mxu0 0
    %536 = vmatpush.bf16.msra.mxu0 0
    %537 = vmatpush.bf16.msra.mxu0 %v505
    %538 = vmatpush.bf16.msra.mxu0 %v501
    %539 = vmatmul.bf16.gmra.mxu0 %v516
    %v540 = vpop.f32.mrf.mxu0
    %v541 = vadd.f32 %v512, %v540
    %v542 = vpop.f32.mrf.mxu0
    %543 = vdwg.mxu0
    %544 = vmatpush.bf16.msra.mxu0 0
    %545 = vmatpush.bf16.msra.mxu0 0
    %546 = vmatpush.bf16.msra.mxu0 0
    %547 = vmatpush.bf16.msra.mxu0 0
    %548 = vmatpush.bf16.msra.mxu0 0
    %549 = vmatpush.bf16.msra.mxu0 0
    %550 = vmatpush.bf16.msra.mxu0 %v506
    %551 = vmatpush.bf16.msra.mxu0 %v502
    %552 = vmatmul.bf16.gmra.mxu0 %v516
    %v553 = vpop.f32.mrf.mxu0
    %v554 = vadd.f32 %v512, %v553
    %v555 = vpop.f32.mrf.mxu0
    %556 = vdwg.mxu0
    %557 = vmatpush.bf16.msra.mxu0 0
    %558 = vmatpush.bf16.msra.mxu0 0
    %559 = vmatpush.bf16.msra.mxu0 0
    %560 = vmatpush.bf16.msra.mxu0 0
    %561 = vmatpush.bf16.msra.mxu0 0
    %562 = vmatpush.bf16.msra.mxu0 0
    %563 = vmatpush.bf16.msra.mxu0 %v507
    %564 = vmatpush.bf16.msra.mxu0 %v503
    %565 = vmatmul.bf16.gmra.mxu0 %v516
    %v566 = vpop.f32.mrf.mxu0
    %v567 = vadd.f32 %v512, %v566
    %v568 = vpop.f32.mrf.mxu0
    %569 = vdwg.mxu0
    %v574 = vrot.slane %v541, 4
    %v575 = vrot.slane %v567, 4
    %v576 = vsel %vm265, %v528, %v574
    %v577 = vsel %vm265, %v554, %v575
    %580 = vst [vmem:[%s8] sm:$0xff] %v576
    %581 = vst [vmem:[%s8 + $0x8] sm:$0xff] %v577
    // Predicated region
    $region34: #{infd_forward.1} parent=1 // pred_check
      _
    $region35: #{infd_forward.1} parent=1 // pred_check_branch
      %583 = sbr.rel (0) target = $region37
    $region36: #{infd_forward.1} parent=1 // pred_region
      _
    $region37: #{infd_forward.1} parent=1 // pred_fallthru
      _
    // Predicated region
    $region38: #{infd_forward.1} parent=1 // pred_check
      _
    $region39: #{infd_forward.1} parent=1 // pred_check_branch
      %585 = sbr.rel (0) target = $region41
    $region40: #{infd_forward.1} parent=1 // pred_region
      %587 = vsyncadd [#allocation3], 0
      %s589 = sshll.u32 [#allocation2], 4
      %s590 = int_to_ptr.vmem [resolvable:$true] %s589
      %s591 = sshll.u32 %s9, 4
      %s592 = int_to_ptr.hbm [resolvable:$true] %s591
      %594 = dma.vmem_to_hbm [thread:$0]  %s590, 512, %s592, [#allocation3]
    $region41: #{infd_forward.1} parent=1 // pred_fallthru
      _
    // Predicated region
    $region42: #{infd_forward.1} parent=1 // pred_check
      _
    $region43: #{infd_forward.1} parent=1 // pred_check_branch
      %596 = sbr.rel (0) target = $region45
    $region44: #{infd_forward.1} parent=1 // pred_region
      %598 = vsyncadd [#allocation4], 0
      %s600 = sshll.u32 %s10, 4
      %s601 = int_to_ptr.vmem [resolvable:$true] %s600
      %603 = dma.smem_to_vmem [#allocation5], 16, %s601, [#allocation4]
    $region45: #{infd_forward.1} parent=1 // pred_fallthru
      _
    // Predicated region
    $region46: #{infd_forward.1} parent=1 // pred_check
      _
    $region47: #{infd_forward.1} parent=1 // pred_check_branch
      %605 = sbr.rel (0) target = $region49
    $region48: #{infd_forward.1} parent=1 // pred_region
      _
    $region49: #{infd_forward.1} parent=1 // pred_fallthru
      _
    // Predicated region
    $region50: #{infd_forward.1} parent=1 // pred_check
      _
    $region51: #{infd_forward.1} parent=1 // pred_check_branch
      %607 = sbr.rel (0) target = $region53
    $region52: #{infd_forward.1} parent=1 // pred_region
      %609 = dma.done [#allocation3], 512
    $region53: #{infd_forward.1} parent=1 // pred_fallthru
      _
    // Predicated region
    $region54: #{infd_forward.1} parent=1 // pred_check
      _
    $region55: #{infd_forward.1} parent=1 // pred_check_branch
      %611 = sbr.rel (0) target = $region57
    $region56: #{infd_forward.1} parent=1 // pred_region
      %613 = dma.done [#allocation4], 16
    $region57: #{infd_forward.1} parent=1 // pred_fallthru
      _
    %614 = sfence
    %615 = vsyncpa [#allocation3], 1
    %616 = vsyncpa [#allocation4], 1

</llo_original>
